<compile_context>
chip_gen: v7x
topology: tpu7x:2x2x1
jax: 0.10.0
libtpu: 0.0.40
codegen_flags: <defaults>
</compile_context>

<pallas_src>
import functools

import jax
import jax.numpy as jnp
from jax.experimental import pallas as pl
from jax.experimental.pallas import tpu as pltpu


def _round_up(x, m):
    return (x + m - 1) // m * m


def _decoder_kernel(xh_ref, c_ref, wg_ref, bg_ref, wfc_ref, bfc_ref,
                    logits_ref, h_out_ref, c_out_ref, h_sc):
    """One LSTM cell step + one vocab tile of the output projection.

    xh_ref:     (Bp, Ep+Hp)  bf16   concat([embedded tokens, h_prev])
    c_ref:      (Bp, Hp)     f32    previous cell state (padded)
    wg_ref:     (Ep+Hp, 4Hp) bf16   fused gate weights, gate blocks [i|f|g|o]
    bg_ref:     (1, 4Hp)     f32    combined bias (b_ih + b_hh), padded
    wfc_ref:    (Hp, TV)     bf16   one vocab tile of the fc weight (transposed)
    bfc_ref:    (1, TV)      f32    matching fc bias tile
    logits_ref: (Bp, TV)     f32    output tile
    h_out_ref:  (Bp, Hp)     f32    new hidden state (written on first tile)
    c_out_ref:  (Bp, Hp)     f32    new cell state (written on first tile)
    h_sc:       (Bp, Hp)     f32    VMEM scratch carrying h_new across tiles
    """
    Hp = c_ref.shape[-1]
    j = pl.program_id(0)

    @pl.when(j == 0)
    def _lstm_cell():
        gates = (jnp.dot(xh_ref[...], wg_ref[...],
                         preferred_element_type=jnp.float32)
                 + bg_ref[...])
        # i and f are contiguous -> one sigmoid pass over a lane-aligned block.
        i_f = jax.nn.sigmoid(gates[:, 0:2 * Hp])
        i_g = i_f[:, 0:Hp]
        f_g = i_f[:, Hp:2 * Hp]
        g_g = jnp.tanh(gates[:, 2 * Hp:3 * Hp])
        o_g = jax.nn.sigmoid(gates[:, 3 * Hp:4 * Hp])

        c_new = f_g * c_ref[...] + i_g * g_g
        h_new = o_g * jnp.tanh(c_new)

        c_out_ref[...] = c_new
        h_out_ref[...] = h_new
        h_sc[...] = h_new

    # Output projection tile: (Bp, TV) = (Bp, Hp) @ (Hp, TV) on the MXU.
    logits_ref[...] = (
        jnp.dot(h_sc[...].astype(wfc_ref.dtype), wfc_ref[...],
                preferred_element_type=jnp.float32)
        + bfc_ref[...])


@functools.partial(jax.jit, static_argnames=("vocab_size",))
def decoder_forward(x_tokens, h, c, packed, *, vocab_size):
    """Mirrors Decoder.forward(x, h, c) for x of shape (B,) int tokens.

    Returns (logits (B, V), h (1, B, H), c (1, B, H)).
    """
    emb = packed["embedding"]    # (V, Ep)      bf16
    wg = packed["w_gates"]       # (Ep+Hp, 4Hp) bf16
    bg = packed["b_gates"]       # (1, 4Hp)     f32
    wfc = packed["w_fc_t"]       # (Hp, Vp)     bf16
    bfc = packed["b_fc"]         # (1, Vp)      f32

    B = x_tokens.shape[0]
    H = h.shape[-1]
    V = vocab_size
    Ep = emb.shape[1]
    Hp = wfc.shape[0]
    Vp = wfc.shape[1]
    Bp = max(8, _round_up(B, 8))
    TV = 512 if Vp % 512 == 0 else Vp
    n_v_tiles = Vp // TV

    # Embedding gather + padding glue (kept outside the kernel).
    # TODO(synk): for an autoregressive decode loop, fold the gather into the
    # kernel via PrefetchScalarGridSpec + pl.Element row index_map and alias
    # h/c in/out to drop the extra HBM round-trip per step.
    x_emb = jnp.take(emb, x_tokens, axis=0)                    # (B, Ep) bf16
    x_emb = jnp.pad(x_emb, ((0, Bp - B), (0, 0)))

    h2 = h.reshape(B, H).astype(jnp.float32)
    c2 = c.reshape(B, H).astype(jnp.float32)
    h_p = jnp.zeros((Bp, Hp), jnp.float32).at[:B, :H].set(h2)
    c_p = jnp.zeros((Bp, Hp), jnp.float32).at[:B, :H].set(c2)

    xh = jnp.concatenate([x_emb, h_p.astype(jnp.bfloat16)], axis=-1)  # (Bp, Ep+Hp)

    cost = pl.CostEstimate(
        flops=2 * Bp * (Ep + Hp) * 4 * Hp + 2 * Bp * Hp * Vp,
        transcendentals=5 * Bp * Hp,
        bytes_accessed=(xh.size * 2 + c_p.size * 4 + wg.size * 2 + bg.size * 4
                        + wfc.size * 2 + bfc.size * 4
                        + Bp * Vp * 4 + 2 * Bp * Hp * 4),
    )

    logits_p, h_new_p, c_new_p = pl.pallas_call(
        _decoder_kernel,
        out_shape=(
            jax.ShapeDtypeStruct((Bp, Vp), jnp.float32),
            jax.ShapeDtypeStruct((Bp, Hp), jnp.float32),
            jax.ShapeDtypeStruct((Bp, Hp), jnp.float32),
        ),
        grid=(n_v_tiles,),
        in_specs=[
            pl.BlockSpec((Bp, Ep + Hp), lambda j: (0, 0)),     # xh
            pl.BlockSpec((Bp, Hp), lambda j: (0, 0)),          # c_prev
            pl.BlockSpec((Ep + Hp, 4 * Hp), lambda j: (0, 0)),  # W_gates
            pl.BlockSpec((1, 4 * Hp), lambda j: (0, 0)),       # b_gates
            pl.BlockSpec((Hp, TV), lambda j: (0, j)),          # W_fc tile
            pl.BlockSpec((1, TV), lambda j: (0, j)),           # b_fc tile
        ],
        out_specs=(
            pl.BlockSpec((Bp, TV), lambda j: (0, j)),          # logits tile
            pl.BlockSpec((Bp, Hp), lambda j: (0, 0)),          # h_new
            pl.BlockSpec((Bp, Hp), lambda j: (0, 0)),          # c_new
        ),
        scratch_shapes=[pltpu.VMEM((Bp, Hp), jnp.float32)],
        compiler_params=pltpu.CompilerParams(
            dimension_semantics=("arbitrary",)),  # scratch carried across V tiles
        cost_estimate=cost,
    )(xh, c_p, wg, bg, wfc, bfc)

    logits = logits_p[:B, :V]
    h_new = h_new_p[:B, :H].reshape(1, B, H)
    c_new = c_new_p[:B, :H].reshape(1, B, H)
    return logits, h_new, c_new


# ----------------------------- parameter plumbing -----------------------------


def init_raw_params(key, vocab_size, embed_dim, hidden_dim):
    """PyTorch-layout parameters in f32 (the reference uses these directly)."""
    ks = jax.random.split(key, 7)
    scale = 0.1
    emb = scale * jax.random.normal(ks[0], (vocab_size, embed_dim), jnp.float32)
    emb = emb.at[0].set(0.0)                                   # padding_idx=0
    w_ih = scale * jax.random.normal(ks[1], (4 * hidden_dim, embed_dim), jnp.float32)
    w_hh = scale * jax.random.normal(ks[2], (4 * hidden_dim, hidden_dim), jnp.float32)
    b_ih = scale * jax.random.normal(ks[3], (4 * hidden_dim,), jnp.float32)
    b_hh = scale * jax.random.normal(ks[4], (4 * hidden_dim,), jnp.float32)
    w_fc = scale * jax.random.normal(ks[5], (vocab_size, hidden_dim), jnp.float32)
    b_fc = scale * jax.random.normal(ks[6], (vocab_size,), jnp.float32)
    return dict(embedding=emb, w_ih=w_ih, w_hh=w_hh, b_ih=b_ih, b_hh=b_hh,
                w_fc=w_fc, b_fc=b_fc)


def _pack_gate_weight(w, H, Hp, in_dim, in_pad):
    """(4H, in_dim) torch gate weight -> (in_pad, 4*Hp), lane-aligned gate blocks."""
    w4 = w.reshape(4, H, in_dim)
    wp = jnp.zeros((4, Hp, in_pad), jnp.float32).at[:, :H, :in_dim].set(w4)
    return jnp.transpose(wp, (2, 0, 1)).reshape(in_pad, 4 * Hp)


def pack_params(raw, vocab_size, embed_dim, hidden_dim):
    """Pad/transpose/fuse the torch-layout params into the kernel layout."""
    V, E, H = vocab_size, embed_dim, hidden_dim
    Ep = _round_up(E, 128)
    Hp = _round_up(H, 128)
    tv_target = 512 if V >= 512 else _round_up(V, 128)
    Vp = _round_up(V, tv_target)

    emb_p = jnp.zeros((V, Ep), jnp.float32).at[:, :E].set(raw["embedding"])

    w_ih_p = _pack_gate_weight(raw["w_ih"], H, Hp, E, Ep)      # (Ep, 4Hp)
    w_hh_p = _pack_gate_weight(raw["w_hh"], H, Hp, H, Hp)      # (Hp, 4Hp)
    w_gates = jnp.concatenate([w_ih_p, w_hh_p], axis=0)        # (Ep+Hp, 4Hp)

    b4 = (raw["b_ih"] + raw["b_hh"]).reshape(4, H)
    b_gates = jnp.zeros((4, Hp), jnp.float32).at[:, :H].set(b4).reshape(1, 4 * Hp)

    w_fc_t = jnp.zeros((Hp, Vp), jnp.float32).at[:H, :V].set(raw["w_fc"].T)
    b_fc = jnp.zeros((1, Vp), jnp.float32).at[0, :V].set(raw["b_fc"])

    return {
        "embedding": emb_p.astype(jnp.bfloat16),   # (V, Ep)
        "w_gates": w_gates.astype(jnp.bfloat16),   # (Ep+Hp, 4Hp)
        "b_gates": b_gates,                        # (1, 4Hp) f32
        "w_fc_t": w_fc_t.astype(jnp.bfloat16),     # (Hp, Vp)
        "b_fc": b_fc,                              # (1, Vp) f32
    }


def _reference_forward(x_tokens, h, c, raw):
    """Pure-JAX f32 reference replicating PyTorch LSTM single-step semantics."""
    x = jnp.take(raw["embedding"], x_tokens, axis=0)           # (B, E)
    B, H = h.shape[1], h.shape[2]
    h2, c2 = h.reshape(B, H), c.reshape(B, H)
    gates = x @ raw["w_ih"].T + h2 @ raw["w_hh"].T + raw["b_ih"] + raw["b_hh"]
    i = jax.nn.sigmoid(gates[:, 0 * H:1 * H])
    f = jax.nn.sigmoid(gates[:, 1 * H:2 * H])
    g = jnp.tanh(gates[:, 2 * H:3 * H])
    o = jax.nn.sigmoid(gates[:, 3 * H:4 * H])
    c_new = f * c2 + i * g
    h_new = o * jnp.tanh(c_new)
    logits = h_new @ raw["w_fc"].T + raw["b_fc"]
    return logits, h_new.reshape(1, B, H), c_new.reshape(1, B, H)


if __name__ == "__main__":
    vocab_size, embed_dim, hidden_dim = 128, 32, 32
    batch = 4

    key = jax.random.PRNGKey(0)
    k_params, k_tok, k_h, k_c = jax.random.split(key, 4)
    raw = init_raw_params(k_params, vocab_size, embed_dim, hidden_dim)
    packed = pack_params(raw, vocab_size, embed_dim, hidden_dim)

    x_tokens = jax.random.randint(k_tok, (batch,), 0, vocab_size, dtype=jnp.int32)
    h0 = 0.1 * jax.random.normal(k_h, (1, batch, hidden_dim), jnp.float32)
    c0 = 0.1 * jax.random.normal(k_c, (1, batch, hidden_dim), jnp.float32)

    logits, h1, c1 = decoder_forward(x_tokens, h0, c0, packed,
                                     vocab_size=vocab_size)
    jax.block_until_ready((logits, h1, c1))

    ref_logits, ref_h, ref_c = _reference_forward(x_tokens, h0, c0, raw)
    assert logits.shape == (batch, vocab_size)
    assert h1.shape == (1, batch, hidden_dim)
    assert c1.shape == (1, batch, hidden_dim)
    # bf16 weights vs f32 reference -> loosened tolerance.
    assert jnp.allclose(logits, ref_logits, atol=2e-2, rtol=2e-2)
    assert jnp.allclose(h1, ref_h, atol=2e-2, rtol=2e-2)
    assert jnp.allclose(c1, ref_c, atol=2e-2, rtol=2e-2)

    print("KERNEL_OK")
</pallas_src>

<mosaic_0001>
module attributes {stable_mosaic.version = 11 : i64} {
  func.func @_decoder_kernel(%arg0: i32, %arg1: memref<8x256xbf16, #tpu.memory_space<vmem>>, %arg2: memref<8x128xf32, #tpu.memory_space<vmem>>, %arg3: memref<256x512xbf16, #tpu.memory_space<vmem>>, %arg4: memref<1x512xf32, #tpu.memory_space<vmem>>, %arg5: memref<128x128xbf16, #tpu.memory_space<vmem>>, %arg6: memref<1x128xf32, #tpu.memory_space<vmem>>, %arg7: memref<8x128xf32, #tpu.memory_space<vmem>>, %arg8: memref<8x128xf32, #tpu.memory_space<vmem>>, %arg9: memref<8x128xf32, #tpu.memory_space<vmem>>, %arg10: memref<8x128xf32, #tpu.memory_space<vmem>>) attributes {dimension_semantics = [#tpu.dimension_semantics<arbitrary>], iteration_bounds = array<i64: 1>, scalar_prefetch = 0 : i64, scratch_operands = 1 : i64, tpu.core_type = #tpu.core_type<tc>, window_params = [{pipeline_mode = #tpu.pipeline_mode<synchronous>, transform_indices = @transform_0, window_bounds = array<i64: 8, 256>}, {pipeline_mode = #tpu.pipeline_mode<synchronous>, transform_indices = @transform_1, window_bounds = array<i64: 8, 128>}, {pipeline_mode = #tpu.pipeline_mode<synchronous>, transform_indices = @transform_2, window_bounds = array<i64: 256, 512>}, {pipeline_mode = #tpu.pipeline_mode<synchronous>, transform_indices = @transform_3, window_bounds = array<i64: 1, 512>}, {transform_indices = @transform_4, window_bounds = array<i64: 128, 128>}, {transform_indices = @transform_5, window_bounds = array<i64: 1, 128>}, {transform_indices = @transform_6, window_bounds = array<i64: 8, 128>}, {pipeline_mode = #tpu.pipeline_mode<synchronous>, transform_indices = @transform_7, window_bounds = array<i64: 8, 128>}, {pipeline_mode = #tpu.pipeline_mode<synchronous>, transform_indices = @transform_8, window_bounds = array<i64: 8, 128>}]} {
    %c0_i32 = arith.constant 0 : i32
    %0 = arith.cmpi eq, %arg0, %c0_i32 : i32
    %1 = arith.extui %0 : i1 to i32
    %c0_i32_0 = arith.constant 0 : i32
    %2 = arith.cmpi ne, %1, %c0_i32_0 : i32
    scf.if %2 {
      %c0_8 = arith.constant 0 : index
      %c0_9 = arith.constant 0 : index
      %11 = vector.load %arg1[%c0_8, %c0_9] : memref<8x256xbf16, #tpu.memory_space<vmem>>, vector<8x256xbf16>
      %c0_10 = arith.constant 0 : index
      %c0_11 = arith.constant 0 : index
      %12 = vector.load %arg3[%c0_10, %c0_11] : memref<256x512xbf16, #tpu.memory_space<vmem>>, vector<256x512xbf16>
      %cst_12 = arith.constant dense<0.000000e+00> : vector<8x512xf32>
      %13 = tpu.matmul %11, %12, %cst_12 {dimension_numbers = #tpu.dot_dimension_numbers<[1], [0], [0], [1], [0, 0, 1, 1], [], []>} : vector<8x256xbf16>, vector<256x512xbf16>, vector<8x512xf32> -> vector<8x512xf32>
      %c0_13 = arith.constant 0 : index
      %c0_14 = arith.constant 0 : index
      %14 = vector.load %arg4[%c0_13, %c0_14] : memref<1x512xf32, #tpu.memory_space<vmem>>, vector<1x512xf32>
      %15 = vector.broadcast %14 : vector<1x512xf32> to vector<8x512xf32>
      %16 = arith.addf %13, %15 : vector<8x512xf32>
      %17 = vector.extract_strided_slice %16 {offsets = [0, 0], sizes = [8, 256], strides = [1, 1]} : vector<8x512xf32> to vector<8x256xf32>
      %18 = arith.negf %17 : vector<8x256xf32>
      %19 = math.exp %18 : vector<8x256xf32>
      %cst_15 = arith.constant 1.000000e+00 : f32
      %20 = vector.broadcast %cst_15 : f32 to vector<8x256xf32>
      %21 = arith.addf %20, %19 : vector<8x256xf32>
      %22 = arith.divf %20, %21 : vector<8x256xf32>
      %23 = vector.extract_strided_slice %22 {offsets = [0, 0], sizes = [8, 128], strides = [1, 1]} : vector<8x256xf32> to vector<8x128xf32>
      %24 = vector.extract_strided_slice %22 {offsets = [0, 128], sizes = [8, 128], strides = [1, 1]} : vector<8x256xf32> to vector<8x128xf32>
      %25 = vector.extract_strided_slice %16 {offsets = [0, 256], sizes = [8, 128], strides = [1, 1]} : vector<8x512xf32> to vector<8x128xf32>
      %26 = math.tanh %25 : vector<8x128xf32>
      %27 = vector.extract_strided_slice %16 {offsets = [0, 384], sizes = [8, 128], strides = [1, 1]} : vector<8x512xf32> to vector<8x128xf32>
      %28 = arith.negf %27 : vector<8x128xf32>
      %29 = math.exp %28 : vector<8x128xf32>
      %cst_16 = arith.constant 1.000000e+00 : f32
      %30 = vector.broadcast %cst_16 : f32 to vector<8x128xf32>
      %31 = arith.addf %30, %29 : vector<8x128xf32>
      %32 = arith.divf %30, %31 : vector<8x128xf32>
      %c0_17 = arith.constant 0 : index
      %c0_18 = arith.constant 0 : index
      %33 = vector.load %arg2[%c0_17, %c0_18] : memref<8x128xf32, #tpu.memory_space<vmem>>, vector<8x128xf32>
      %34 = arith.mulf %24, %33 : vector<8x128xf32>
      %35 = arith.mulf %23, %26 : vector<8x128xf32>
      %36 = arith.addf %34, %35 : vector<8x128xf32>
      %37 = math.tanh %36 : vector<8x128xf32>
      %38 = arith.mulf %32, %37 : vector<8x128xf32>
      %c0_19 = arith.constant 0 : index
      %c0_20 = arith.constant 0 : index
      %39 = vector.load %arg9[%c0_19, %c0_20] : memref<8x128xf32, #tpu.memory_space<vmem>>, vector<8x128xf32>
      tpu.vector_store %arg9[%c0_19, %c0_20], %36 {strides = array<i32>} : memref<8x128xf32, #tpu.memory_space<vmem>>, vector<8x128xf32>,
      %c0_21 = arith.constant 0 : index
      %c0_22 = arith.constant 0 : index
      %40 = vector.load %arg8[%c0_21, %c0_22] : memref<8x128xf32, #tpu.memory_space<vmem>>, vector<8x128xf32>
      tpu.vector_store %arg8[%c0_21, %c0_22], %38 {strides = array<i32>} : memref<8x128xf32, #tpu.memory_space<vmem>>, vector<8x128xf32>,
      %c0_23 = arith.constant 0 : index
      %c0_24 = arith.constant 0 : index
      %41 = vector.load %arg10[%c0_23, %c0_24] : memref<8x128xf32, #tpu.memory_space<vmem>>, vector<8x128xf32>
      tpu.vector_store %arg10[%c0_23, %c0_24], %38 {strides = array<i32>} : memref<8x128xf32, #tpu.memory_space<vmem>>, vector<8x128xf32>,
    } else {
    }
    %c0 = arith.constant 0 : index
    %c0_1 = arith.constant 0 : index
    %3 = vector.load %arg10[%c0, %c0_1] : memref<8x128xf32, #tpu.memory_space<vmem>>, vector<8x128xf32>
    %4 = arith.truncf %3 : vector<8x128xf32> to vector<8x128xbf16>
    %c0_2 = arith.constant 0 : index
    %c0_3 = arith.constant 0 : index
    %5 = vector.load %arg5[%c0_2, %c0_3] : memref<128x128xbf16, #tpu.memory_space<vmem>>, vector<128x128xbf16>
    %cst = arith.constant dense<0.000000e+00> : vector<8x128xf32>
    %6 = tpu.matmul %4, %5, %cst {dimension_numbers = #tpu.dot_dimension_numbers<[1], [0], [0], [1], [0, 0, 1, 1], [], []>} : vector<8x128xbf16>, vector<128x128xbf16>, vector<8x128xf32> -> vector<8x128xf32>
    %c0_4 = arith.constant 0 : index
    %c0_5 = arith.constant 0 : index
    %7 = vector.load %arg6[%c0_4, %c0_5] : memref<1x128xf32, #tpu.memory_space<vmem>>, vector<1x128xf32>
    %8 = vector.broadcast %7 : vector<1x128xf32> to vector<8x128xf32>
    %9 = arith.addf %6, %8 : vector<8x128xf32>
    %c0_6 = arith.constant 0 : index
    %c0_7 = arith.constant 0 : index
    %10 = vector.load %arg7[%c0_6, %c0_7] : memref<8x128xf32, #tpu.memory_space<vmem>>, vector<8x128xf32>
    tpu.vector_store %arg7[%c0_6, %c0_7], %9 {strides = array<i32>} : memref<8x128xf32, #tpu.memory_space<vmem>>, vector<8x128xf32>,
    return
  }
  func.func @transform_0(%arg0: i32) -> (i32, i32) {
    %c0_i32 = arith.constant 0 : i32
    %c0_i32_0 = arith.constant 0 : i32
    %c0_i32_1 = arith.constant 0 : i32
    return %c0_i32, %c0_i32_0 : i32, i32
  }
  func.func @transform_1(%arg0: i32) -> (i32, i32) {
    %c0_i32 = arith.constant 0 : i32
    %c0_i32_0 = arith.constant 0 : i32
    %c0_i32_1 = arith.constant 0 : i32
    return %c0_i32, %c0_i32_0 : i32, i32
  }
  func.func @transform_2(%arg0: i32) -> (i32, i32) {
    %c0_i32 = arith.constant 0 : i32
    %c0_i32_0 = arith.constant 0 : i32
    %c0_i32_1 = arith.constant 0 : i32
    return %c0_i32, %c0_i32_0 : i32, i32
  }
  func.func @transform_3(%arg0: i32) -> (i32, i32) {
    %c0_i32 = arith.constant 0 : i32
    %c0_i32_0 = arith.constant 0 : i32
    %c0_i32_1 = arith.constant 0 : i32
    return %c0_i32, %c0_i32_0 : i32, i32
  }
  func.func @transform_4(%arg0: i32) -> (i32, i32) {
    %c0_i32 = arith.constant 0 : i32
    %c0_i32_0 = arith.constant 0 : i32
    return %c0_i32, %arg0 : i32, i32
  }
  func.func @transform_5(%arg0: i32) -> (i32, i32) {
    %c0_i32 = arith.constant 0 : i32
    %c0_i32_0 = arith.constant 0 : i32
    return %c0_i32, %arg0 : i32, i32
  }
  func.func @transform_6(%arg0: i32) -> (i32, i32) {
    %c0_i32 = arith.constant 0 : i32
    %c0_i32_0 = arith.constant 0 : i32
    return %c0_i32, %arg0 : i32, i32
  }
  func.func @transform_7(%arg0: i32) -> (i32, i32) {
    %c0_i32 = arith.constant 0 : i32
    %c0_i32_0 = arith.constant 0 : i32
    %c0_i32_1 = arith.constant 0 : i32
    return %c0_i32, %c0_i32_0 : i32, i32
  }
  func.func @transform_8(%arg0: i32) -> (i32, i32) {
    %c0_i32 = arith.constant 0 : i32
    %c0_i32_0 = arith.constant 0 : i32
    %c0_i32_1 = arith.constant 0 : i32
    return %c0_i32, %c0_i32_0 : i32, i32
  }
}

</mosaic_0001>

<llo_original>
// kernel: decoder_forward.1
$region0: #{decoder_forward.1}
  #allocation0 [shape = 'u32[]', space=smem, size = 0x4, offset = 0x4, fixed_abs, tag = 'smem constant byte address 0x4 - core index']
  #allocation1 [shape = 'u32[144,128]{1,0:T(1,128)}', space=vmem, size = 0x12000, scoped, tag = 'internal scratch']
  #allocation2 [shape = 'f32[8,128]{1,0:T(8,128)}', space=vmem, size = 0x1000, scoped, tag = 'scratch operand']
  %s0 = inlined_call_operand.vmem [shape: bf16[8,256], index: 0, kind: input, shape index: {}]
  %s1 = inlined_call_operand.vmem [shape: f32[8,128], index: 1, kind: input, shape index: {}]
  %s2 = inlined_call_operand.hbm [shape: bf16[256,512], index: 2, kind: input, shape index: {}]
  %s3 = inlined_call_operand.vmem [shape: f32[1,512], index: 3, kind: input, shape index: {}]
  %s4 = inlined_call_operand.vmem [shape: bf16[128,128], index: 4, kind: input, shape index: {}]
  %s5 = inlined_call_operand.vmem [shape: f32[1,128], index: 5, kind: input, shape index: {}]
  %s6 = inlined_call_operand.vmem [shape: f32[8,128], index: 6, kind: output, shape index: {0}]
  %s7 = inlined_call_operand.vmem [shape: f32[8,128], index: 7, kind: output, shape index: {1}]
  %s8 = inlined_call_operand.vmem [shape: f32[8,128], index: 8, kind: output, shape index: {2}]
  %9 = xla_tuple %s6, %s7, %s8
  %s10 = sld [smem:[#allocation0]]
  $region58: #{decoder_forward.1} parent=0
    _
  %s12 = ssub.s32 1, %s10
  %s13 = scalar_select 0, %s12, %s10
  $region1: #{decoder_forward.1} parent=0
    #allocation3 [shape = 'u8[262144]{0}', space=vmem, size = 0x40000, scoped, tag = 'input window, operand 2, single buffered']
    #allocation4 [shape = 's32[1]{0}', space=sflag, size = 0x4, scoped, tag = 'scoped memory for decoder_forward.1']
    %14 = vsyncpa [#allocation4], 0
    // Predicated region
    $region2: #{decoder_forward.1} parent=1 // pred_check
      _
    $region3: #{decoder_forward.1} parent=1 // pred_check_branch
      %16 = sbr.rel (0) target = $region5
    $region4: #{decoder_forward.1} parent=1 // pred_region
      _
    $region5: #{decoder_forward.1} parent=1 // pred_fallthru
      _
    // Predicated region
    $region6: #{decoder_forward.1} parent=1 // pred_check
      _
    $region7: #{decoder_forward.1} parent=1 // pred_check_branch
      %18 = sbr.rel (0) target = $region9
    $region8: #{decoder_forward.1} parent=1 // pred_region
      _
    $region9: #{decoder_forward.1} parent=1 // pred_fallthru
      _
    // Predicated region
    $region10: #{decoder_forward.1} parent=1 // pred_check
      _
    $region11: #{decoder_forward.1} parent=1 // pred_check_branch
      %20 = sbr.rel (0) target = $region13
    $region12: #{decoder_forward.1} parent=1 // pred_region
      %s22 = ssub.s32 8192, 8192
      %23 = vsyncadd [#allocation4], %s22
      %s24 = sshll.u32 [#allocation3], 4
      %s25 = int_to_ptr.vmem [resolvable:$true] %s24
      %30 = dma.hbm_to_vmem [thread:$0]  %s2, 8192, %s25, [#allocation4], 256, 256, 16
    $region13: #{decoder_forward.1} parent=1 // pred_fallthru
      _
    // Predicated region
    $region14: #{decoder_forward.1} parent=1 // pred_check
      _
    $region15: #{decoder_forward.1} parent=1 // pred_check_branch
      %32 = sbr.rel (0) target = $region17
    $region16: #{decoder_forward.1} parent=1 // pred_region
      _
    $region17: #{decoder_forward.1} parent=1 // pred_fallthru
      _
    // Predicated region
    $region18: #{decoder_forward.1} parent=1 // pred_check
      _
    $region19: #{decoder_forward.1} parent=1 // pred_check_branch
      %34 = sbr.rel (0) target = $region21
    $region20: #{decoder_forward.1} parent=1 // pred_region
      _
    $region21: #{decoder_forward.1} parent=1 // pred_fallthru
      _
    // Predicated region
    $region22: #{decoder_forward.1} parent=1 // pred_check
      _
    $region23: #{decoder_forward.1} parent=1 // pred_check_branch
      %36 = sbr.rel (0) target = $region25
    $region24: #{decoder_forward.1} parent=1 // pred_region
      _
    $region25: #{decoder_forward.1} parent=1 // pred_fallthru
      _
    // Predicated region
    $region26: #{decoder_forward.1} parent=1 // pred_check
      _
    $region27: #{decoder_forward.1} parent=1 // pred_check_branch
      %38 = sbr.rel (0) target = $region29
    $region28: #{decoder_forward.1} parent=1 // pred_region
      %39 = dma.done [#allocation4], 8192
    $region29: #{decoder_forward.1} parent=1 // pred_fallthru
      _
    %p41 = scmp.eq.s32.totalorder 0, 0
    // Predicated region
    $region30: #{decoder_forward.1} parent=1 // pred_check
      %p42 = pneg %p41
    $region31: #{decoder_forward.1} parent=1 // pred_check_branch
      %44 = sbr.rel (%p42) target = $region33
    $region32: #{decoder_forward.1} parent=1 // pred_region
      %v45 = vld [vmem:[%s0] sm:$0xff]
      %v46 = vld [vmem:[#allocation3] sm:$0xff]
      %v47 = vld [vmem:[#allocation3 + $0x8] sm:$0xff]
      %v48 = vld [vmem:[#allocation3 + $0x10] sm:$0xff]
      %v49 = vld [vmem:[#allocation3 + $0x18] sm:$0xff]
      %v50 = vld [vmem:[#allocation3 + $0x20] sm:$0xff]
      %v51 = vld [vmem:[#allocation3 + $0x28] sm:$0xff]
      %v52 = vld [vmem:[#allocation3 + $0x30] sm:$0xff]
      %v53 = vld [vmem:[#allocation3 + $0x38] sm:$0xff]
      %v54 = vld [vmem:[#allocation3 + $0x40] sm:$0xff]
      %v55 = vld [vmem:[#allocation3 + $0x48] sm:$0xff]
      %v56 = vld [vmem:[#allocation3 + $0x50] sm:$0xff]
      %v57 = vld [vmem:[#allocation3 + $0x58] sm:$0xff]
      %v58 = vld [vmem:[#allocation3 + $0x60] sm:$0xff]
      %v59 = vld [vmem:[#allocation3 + $0x68] sm:$0xff]
      %v60 = vld [vmem:[#allocation3 + $0x70] sm:$0xff]
      %v61 = vld [vmem:[#allocation3 + $0x78] sm:$0xff]
      %v62 = vld [vmem:[#allocation3 + $0x80] sm:$0xff]
      %v63 = vld [vmem:[#allocation3 + $0x88] sm:$0xff]
      %v64 = vld [vmem:[#allocation3 + $0x90] sm:$0xff]
      %v65 = vld [vmem:[#allocation3 + $0x98] sm:$0xff]
      %v66 = vld [vmem:[#allocation3 + $0xa0] sm:$0xff]
      %v67 = vld [vmem:[#allocation3 + $0xa8] sm:$0xff]
      %v68 = vld [vmem:[#allocation3 + $0xb0] sm:$0xff]
      %v69 = vld [vmem:[#allocation3 + $0xb8] sm:$0xff]
      %v70 = vld [vmem:[#allocation3 + $0xc0] sm:$0xff]
      %v71 = vld [vmem:[#allocation3 + $0xc8] sm:$0xff]
      %v72 = vld [vmem:[#allocation3 + $0xd0] sm:$0xff]
      %v73 = vld [vmem:[#allocation3 + $0xd8] sm:$0xff]
      %v74 = vld [vmem:[#allocation3 + $0xe0] sm:$0xff]
      %v75 = vld [vmem:[#allocation3 + $0xe8] sm:$0xff]
      %v76 = vld [vmem:[#allocation3 + $0xf0] sm:$0xff]
      %v77 = vld [vmem:[#allocation3 + $0xf8] sm:$0xff]
      %v78 = vld [vmem:[#allocation3 + $0x100] sm:$0xff]
      %v79 = vld [vmem:[#allocation3 + $0x108] sm:$0xff]
      %v80 = vld [vmem:[#allocation3 + $0x110] sm:$0xff]
      %v81 = vld [vmem:[#allocation3 + $0x118] sm:$0xff]
      %v82 = vld [vmem:[#allocation3 + $0x120] sm:$0xff]
      %v83 = vld [vmem:[#allocation3 + $0x128] sm:$0xff]
      %v84 = vld [vmem:[#allocation3 + $0x130] sm:$0xff]
      %v85 = vld [vmem:[#allocation3 + $0x138] sm:$0xff]
      %v86 = vld [vmem:[#allocation3 + $0x140] sm:$0xff]
      %v87 = vld [vmem:[#allocation3 + $0x148] sm:$0xff]
      %v88 = vld [vmem:[#allocation3 + $0x150] sm:$0xff]
      %v89 = vld [vmem:[#allocation3 + $0x158] sm:$0xff]
      %v90 = vld [vmem:[#allocation3 + $0x160] sm:$0xff]
      %v91 = vld [vmem:[#allocation3 + $0x168] sm:$0xff]
      %v92 = vld [vmem:[#allocation3 + $0x170] sm:$0xff]
      %v93 = vld [vmem:[#allocation3 + $0x178] sm:$0xff]
      %v94 = vld [vmem:[#allocation3 + $0x180] sm:$0xff]
      %v95 = vld [vmem:[#allocation3 + $0x188] sm:$0xff]
      %v96 = vld [vmem:[#allocation3 + $0x190] sm:$0xff]
      %v97 = vld [vmem:[#allocation3 + $0x198] sm:$0xff]
      %v98 = vld [vmem:[#allocation3 + $0x1a0] sm:$0xff]
      %v99 = vld [vmem:[#allocation3 + $0x1a8] sm:$0xff]
      %v100 = vld [vmem:[#allocation3 + $0x1b0] sm:$0xff]
      %v101 = vld [vmem:[#allocation3 + $0x1b8] sm:$0xff]
      %v102 = vld [vmem:[#allocation3 + $0x1c0] sm:$0xff]
      %v103 = vld [vmem:[#allocation3 + $0x1c8] sm:$0xff]
      %v104 = vld [vmem:[#allocation3 + $0x1d0] sm:$0xff]
      %v105 = vld [vmem:[#allocation3 + $0x1d8] sm:$0xff]
      %v106 = vld [vmem:[#allocation3 + $0x1e0] sm:$0xff]
      %v107 = vld [vmem:[#allocation3 + $0x1e8] sm:$0xff]
      %v108 = vld [vmem:[#allocation3 + $0x1f0] sm:$0xff]
      %v109 = vld [vmem:[#allocation3 + $0x1f8] sm:$0xff]
      %v110 = vld [vmem:[%s3] sm:$0xf]
      %v112 = vlaneseq
      %v113 = vshrl.u32 %v112, 7
      %v114 = vsub.s32 0, %v113
      %v115 = vrot.slane %v110, %v114
      %v116 = vlaneseq
      %v117 = vshrl.u32 %v116, 7
      %v118 = vsub.s32 1, %v117
      %v119 = vrot.slane %v110, %v118
      %v120 = vlaneseq
      %v121 = vshrl.u32 %v120, 7
      %v122 = vsub.s32 2, %v121
      %v123 = vrot.slane %v110, %v122
      %v124 = vlaneseq
      %v125 = vshrl.u32 %v124, 7
      %v126 = vsub.s32 3, %v125
      %v127 = vrot.slane %v110, %v126
      %v133 = vunpack.c.l.b16 %v45
      %v134 = vunpack.c.h.b16 %v45
      %v135 = vpack.c.b16 %v133, %v133
      %v136 = vpack.c.b16 %v134, %v134
      %v203 = vunpack.c.l.b16 %v46
      %v204 = vunpack.c.h.b16 %v46
      %v205 = vunpack.c.l.b16 %v47
      %v206 = vunpack.c.h.b16 %v47
      %v207 = vunpack.c.l.b16 %v48
      %v208 = vunpack.c.h.b16 %v48
      %v209 = vunpack.c.l.b16 %v49
      %v210 = vunpack.c.h.b16 %v49
      %v211 = vunpack.c.l.b16 %v50
      %v212 = vunpack.c.h.b16 %v50
      %v213 = vunpack.c.l.b16 %v51
      %v214 = vunpack.c.h.b16 %v51
      %v215 = vunpack.c.l.b16 %v52
      %v216 = vunpack.c.h.b16 %v52
      %v217 = vunpack.c.l.b16 %v53
      %v218 = vunpack.c.h.b16 %v53
      %v219 = vunpack.c.l.b16 %v54
      %v220 = vunpack.c.h.b16 %v54
      %v221 = vunpack.c.l.b16 %v55
      %v222 = vunpack.c.h.b16 %v55
      %v223 = vunpack.c.l.b16 %v56
      %v224 = vunpack.c.h.b16 %v56
      %v225 = vunpack.c.l.b16 %v57
      %v226 = vunpack.c.h.b16 %v57
      %v227 = vunpack.c.l.b16 %v58
      %v228 = vunpack.c.h.b16 %v58
      %v229 = vunpack.c.l.b16 %v59
      %v230 = vunpack.c.h.b16 %v59
      %v231 = vunpack.c.l.b16 %v60
      %v232 = vunpack.c.h.b16 %v60
      %v233 = vunpack.c.l.b16 %v61
      %v234 = vunpack.c.h.b16 %v61
      %v235 = vunpack.c.l.b16 %v62
      %v236 = vunpack.c.h.b16 %v62
      %v237 = vunpack.c.l.b16 %v63
      %v238 = vunpack.c.h.b16 %v63
      %v239 = vunpack.c.l.b16 %v64
      %v240 = vunpack.c.h.b16 %v64
      %v241 = vunpack.c.l.b16 %v65
      %v242 = vunpack.c.h.b16 %v65
      %v243 = vunpack.c.l.b16 %v66
      %v244 = vunpack.c.h.b16 %v66
      %v245 = vunpack.c.l.b16 %v67
      %v246 = vunpack.c.h.b16 %v67
      %v247 = vunpack.c.l.b16 %v68
      %v248 = vunpack.c.h.b16 %v68
      %v249 = vunpack.c.l.b16 %v69
      %v250 = vunpack.c.h.b16 %v69
      %v251 = vunpack.c.l.b16 %v70
      %v252 = vunpack.c.h.b16 %v70
      %v253 = vunpack.c.l.b16 %v71
      %v254 = vunpack.c.h.b16 %v71
      %v255 = vunpack.c.l.b16 %v72
      %v256 = vunpack.c.h.b16 %v72
      %v257 = vunpack.c.l.b16 %v73
      %v258 = vunpack.c.h.b16 %v73
      %v259 = vunpack.c.l.b16 %v74
      %v260 = vunpack.c.h.b16 %v74
      %v261 = vunpack.c.l.b16 %v75
      %v262 = vunpack.c.h.b16 %v75
      %v263 = vunpack.c.l.b16 %v76
      %v264 = vunpack.c.h.b16 %v76
      %v265 = vunpack.c.l.b16 %v77
      %v266 = vunpack.c.h.b16 %v77
      %v267 = vunpack.c.l.b16 %v78
      %v268 = vunpack.c.h.b16 %v78
      %v269 = vunpack.c.l.b16 %v79
      %v270 = vunpack.c.h.b16 %v79
      %v271 = vunpack.c.l.b16 %v80
      %v272 = vunpack.c.h.b16 %v80
      %v273 = vunpack.c.l.b16 %v81
      %v274 = vunpack.c.h.b16 %v81
      %v275 = vunpack.c.l.b16 %v82
      %v276 = vunpack.c.h.b16 %v82
      %v277 = vunpack.c.l.b16 %v83
      %v278 = vunpack.c.h.b16 %v83
      %v279 = vunpack.c.l.b16 %v84
      %v280 = vunpack.c.h.b16 %v84
      %v281 = vunpack.c.l.b16 %v85
      %v282 = vunpack.c.h.b16 %v85
      %v283 = vunpack.c.l.b16 %v86
      %v284 = vunpack.c.h.b16 %v86
      %v285 = vunpack.c.l.b16 %v87
      %v286 = vunpack.c.h.b16 %v87
      %v287 = vunpack.c.l.b16 %v88
      %v288 = vunpack.c.h.b16 %v88
      %v289 = vunpack.c.l.b16 %v89
      %v290 = vunpack.c.h.b16 %v89
      %v291 = vunpack.c.l.b16 %v90
      %v292 = vunpack.c.h.b16 %v90
      %v293 = vunpack.c.l.b16 %v91
      %v294 = vunpack.c.h.b16 %v91
      %v295 = vunpack.c.l.b16 %v92
      %v296 = vunpack.c.h.b16 %v92
      %v297 = vunpack.c.l.b16 %v93
      %v298 = vunpack.c.h.b16 %v93
      %v299 = vunpack.c.l.b16 %v94
      %v300 = vunpack.c.h.b16 %v94
      %v301 = vunpack.c.l.b16 %v95
      %v302 = vunpack.c.h.b16 %v95
      %v303 = vunpack.c.l.b16 %v96
      %v304 = vunpack.c.h.b16 %v96
      %v305 = vunpack.c.l.b16 %v97
      %v306 = vunpack.c.h.b16 %v97
      %v307 = vunpack.c.l.b16 %v98
      %v308 = vunpack.c.h.b16 %v98
      %v309 = vunpack.c.l.b16 %v99
      %v310 = vunpack.c.h.b16 %v99
      %v311 = vunpack.c.l.b16 %v100
      %v312 = vunpack.c.h.b16 %v100
      %v313 = vunpack.c.l.b16 %v101
      %v314 = vunpack.c.h.b16 %v101
      %v315 = vunpack.c.l.b16 %v102
      %v316 = vunpack.c.h.b16 %v102
      %v317 = vunpack.c.l.b16 %v103
      %v318 = vunpack.c.h.b16 %v103
      %v319 = vunpack.c.l.b16 %v104
      %v320 = vunpack.c.h.b16 %v104
      %v321 = vunpack.c.l.b16 %v105
      %v322 = vunpack.c.h.b16 %v105
      %v323 = vunpack.c.l.b16 %v106
      %v324 = vunpack.c.h.b16 %v106
      %v325 = vunpack.c.l.b16 %v107
      %v326 = vunpack.c.h.b16 %v107
      %v327 = vunpack.c.l.b16 %v108
      %v328 = vunpack.c.h.b16 %v108
      %v329 = vunpack.c.l.b16 %v109
      %v330 = vunpack.c.h.b16 %v109
      %v331 = vpack.c.b16 %v207, %v203
      %v332 = vpack.c.b16 %v208, %v204
      %v333 = vpack.c.b16 %v209, %v205
      %v334 = vpack.c.b16 %v210, %v206
      %v335 = vpack.c.b16 %v215, %v211
      %v336 = vpack.c.b16 %v216, %v212
      %v337 = vpack.c.b16 %v217, %v213
      %v338 = vpack.c.b16 %v218, %v214
      %v339 = vpack.c.b16 %v223, %v219
      %v340 = vpack.c.b16 %v224, %v220
      %v341 = vpack.c.b16 %v225, %v221
      %v342 = vpack.c.b16 %v226, %v222
      %v343 = vpack.c.b16 %v231, %v227
      %v344 = vpack.c.b16 %v232, %v228
      %v345 = vpack.c.b16 %v233, %v229
      %v346 = vpack.c.b16 %v234, %v230
      %v347 = vpack.c.b16 %v239, %v235
      %v348 = vpack.c.b16 %v240, %v236
      %v349 = vpack.c.b16 %v241, %v237
      %v350 = vpack.c.b16 %v242, %v238
      %v351 = vpack.c.b16 %v247, %v243
      %v352 = vpack.c.b16 %v248, %v244
      %v353 = vpack.c.b16 %v249, %v245
      %v354 = vpack.c.b16 %v250, %v246
      %v355 = vpack.c.b16 %v255, %v251
      %v356 = vpack.c.b16 %v256, %v252
      %v357 = vpack.c.b16 %v257, %v253
      %v358 = vpack.c.b16 %v258, %v254
      %v359 = vpack.c.b16 %v263, %v259
      %v360 = vpack.c.b16 %v264, %v260
      %v361 = vpack.c.b16 %v265, %v261
      %v362 = vpack.c.b16 %v266, %v262
      %v363 = vpack.c.b16 %v271, %v267
      %v364 = vpack.c.b16 %v272, %v268
      %v365 = vpack.c.b16 %v273, %v269
      %v366 = vpack.c.b16 %v274, %v270
      %v367 = vpack.c.b16 %v279, %v275
      %v368 = vpack.c.b16 %v280, %v276
      %v369 = vpack.c.b16 %v281, %v277
      %v370 = vpack.c.b16 %v282, %v278
      %v371 = vpack.c.b16 %v287, %v283
      %v372 = vpack.c.b16 %v288, %v284
      %v373 = vpack.c.b16 %v289, %v285
      %v374 = vpack.c.b16 %v290, %v286
      %v375 = vpack.c.b16 %v295, %v291
      %v376 = vpack.c.b16 %v296, %v292
      %v377 = vpack.c.b16 %v297, %v293
      %v378 = vpack.c.b16 %v298, %v294
      %v379 = vpack.c.b16 %v303, %v299
      %v380 = vpack.c.b16 %v304, %v300
      %v381 = vpack.c.b16 %v305, %v301
      %v382 = vpack.c.b16 %v306, %v302
      %v383 = vpack.c.b16 %v311, %v307
      %v384 = vpack.c.b16 %v312, %v308
      %v385 = vpack.c.b16 %v313, %v309
      %v386 = vpack.c.b16 %v314, %v310
      %v387 = vpack.c.b16 %v319, %v315
      %v388 = vpack.c.b16 %v320, %v316
      %v389 = vpack.c.b16 %v321, %v317
      %v390 = vpack.c.b16 %v322, %v318
      %v391 = vpack.c.b16 %v327, %v323
      %v392 = vpack.c.b16 %v328, %v324
      %v393 = vpack.c.b16 %v329, %v325
      %v394 = vpack.c.b16 %v330, %v326
      %459 = vmatprep.subr.bf16.mxu0 %v332
      %460 = vmatpush1.bf16.msra.mxu0 %v331
      %461 = vmatprep.subr.bf16.mxu0 %v336
      %462 = vmatpush1.bf16.msra.mxu0 %v335
      %463 = vmatprep.subr.bf16.mxu0 %v340
      %464 = vmatpush1.bf16.msra.mxu0 %v339
      %465 = vmatprep.subr.bf16.mxu0 %v344
      %466 = vmatpush1.bf16.msra.mxu0 %v343
      %467 = vmatprep.subr.bf16.mxu0 %v348
      %468 = vmatpush1.bf16.msra.mxu0 %v347
      %469 = vmatprep.subr.bf16.mxu0 %v352
      %470 = vmatpush1.bf16.msra.mxu0 %v351
      %471 = vmatprep.subr.bf16.mxu0 %v356
      %472 = vmatpush1.bf16.msra.mxu0 %v355
      %473 = vmatprep.subr.bf16.mxu0 %v360
      %474 = vmatpush1.bf16.msra.mxu0 %v359
      %475 = vmatprep.subr.bf16.mxu0 %v364
      %476 = vmatpush1.bf16.msra.mxu0 %v363
      %477 = vmatprep.subr.bf16.mxu0 %v368
      %478 = vmatpush1.bf16.msra.mxu0 %v367
      %479 = vmatprep.subr.bf16.mxu0 %v372
      %480 = vmatpush1.bf16.msra.mxu0 %v371
      %481 = vmatprep.subr.bf16.mxu0 %v376
      %482 = vmatpush1.bf16.msra.mxu0 %v375
      %483 = vmatprep.subr.bf16.mxu0 %v380
      %484 = vmatpush1.bf16.msra.mxu0 %v379
      %485 = vmatprep.subr.bf16.mxu0 %v384
      %486 = vmatpush1.bf16.msra.mxu0 %v383
      %487 = vmatprep.subr.bf16.mxu0 %v388
      %488 = vmatpush1.bf16.msra.mxu0 %v387
      %489 = vmatprep.subr.bf16.mxu0 %v392
      %490 = vmatpush1.bf16.msra.mxu0 %v391
      %491 = vmatprep.mubr.bf16.mxu0 %v136
      %492 = vmatmul.mubr.bf16.gmra.mrb[0].mxu0 %v135
      %v493 = vpop.f32.mrb[0].mxu0
      %v494 = vadd.f32 %v115, %v493
      %v495 = vpop.f32.mrb[0].mxu0
      %v496 = vadd.f32 %v119, %v495
      %v497 = vpop.f32.mrb[0].mxu0
      %v498 = vpop.f32.mrb[0].mxu0
      %499 = vdwg.mxu0
      %500 = vmatprep.subr.bf16.mxu0 %v334
      %501 = vmatpush1.bf16.msra.mxu0 %v333
      %502 = vmatprep.subr.bf16.mxu0 %v338
      %503 = vmatpush1.bf16.msra.mxu0 %v337
      %504 = vmatprep.subr.bf16.mxu0 %v342
      %505 = vmatpush1.bf16.msra.mxu0 %v341
      %506 = vmatprep.subr.bf16.mxu0 %v346
      %507 = vmatpush1.bf16.msra.mxu0 %v345
      %508 = vmatprep.subr.bf16.mxu0 %v350
      %509 = vmatpush1.bf16.msra.mxu0 %v349
      %510 = vmatprep.subr.bf16.mxu0 %v354
      %511 = vmatpush1.bf16.msra.mxu0 %v353
      %512 = vmatprep.subr.bf16.mxu0 %v358
      %513 = vmatpush1.bf16.msra.mxu0 %v357
      %514 = vmatprep.subr.bf16.mxu0 %v362
      %515 = vmatpush1.bf16.msra.mxu0 %v361
      %516 = vmatprep.subr.bf16.mxu0 %v366
      %517 = vmatpush1.bf16.msra.mxu0 %v365
      %518 = vmatprep.subr.bf16.mxu0 %v370
      %519 = vmatpush1.bf16.msra.mxu0 %v369
      %520 = vmatprep.subr.bf16.mxu0 %v374
      %521 = vmatpush1.bf16.msra.mxu0 %v373
      %522 = vmatprep.subr.bf16.mxu0 %v378
      %523 = vmatpush1.bf16.msra.mxu0 %v377
      %524 = vmatprep.subr.bf16.mxu0 %v382
      %525 = vmatpush1.bf16.msra.mxu0 %v381
      %526 = vmatprep.subr.bf16.mxu0 %v386
      %527 = vmatpush1.bf16.msra.mxu0 %v385
      %528 = vmatprep.subr.bf16.mxu0 %v390
      %529 = vmatpush1.bf16.msra.mxu0 %v389
      %530 = vmatprep.subr.bf16.mxu0 %v394
      %531 = vmatpush1.bf16.msra.mxu0 %v393
      %532 = vmatprep.mubr.bf16.mxu0 %v136
      %533 = vmatmul.mubr.bf16.gmra.mrb[0].mxu0 %v135
      %v534 = vpop.f32.mrb[0].mxu0
      %v535 = vadd.f32 %v123, %v534
      %v536 = vpop.f32.mrb[0].mxu0
      %v537 = vadd.f32 %v127, %v536
      %v538 = vpop.f32.mrb[0].mxu0
      %v539 = vpop.f32.mrb[0].mxu0
      %540 = vdwg.mxu0
      %v541 = vxor.u32 %v494, 2147483648
      %v542 = vxor.u32 %v496, 2147483648
      %v543 = vmul.f32 %v541, 1.442695
      %v544 = vpow.pop %v543
      %v545 = vmul.f32 %v542, 1.442695
      %v546 = vpow.pop %v545
      %v547 = vadd.f32 %v544, 1.0
      %v548 = vadd.f32 %v546, 1.0
      %v549 = vrcp.pop %v547
      %v550 = vmul.f32 1.0, %v549
      %v551 = vrcp.pop %v548
      %v552 = vmul.f32 1.0, %v551
      %v553 = vtanh.pop %v535
      %v554 = vxor.u32 %v537, 2147483648
      %v555 = vmul.f32 %v554, 1.442695
      %v556 = vpow.pop %v555
      %v557 = vadd.f32 %v556, 1.0
      %v558 = vrcp.pop %v557
      %v559 = vmul.f32 1.0, %v558
      %v560 = vld [vmem:[%s1] sm:$0xff]
      %v561 = vmul.f32 %v552, %v560
      %v562 = vmul.f32 %v550, %v553
      %v563 = vadd.f32 %v561, %v562
      %v564 = vtanh.pop %v563
      %v565 = vmul.f32 %v559, %v564
      %566 = vst [vmem:[%s8] sm:$0xff] %v563
      %567 = vst [vmem:[%s7] sm:$0xff] %v565
      %568 = vst [vmem:[#allocation2] sm:$0xff] %v565
    $region33: #{decoder_forward.1} parent=1 // pred_fallthru
      _
    %v569 = vld [vmem:[#allocation2] sm:$0xff]
    %v570 = vpack.c.bf16 %v569, %v569
    %v571 = vld [vmem:[%s4] sm:$0xf]
    %v572 = vld [vmem:[%s4 + $0x4] sm:$0xf]
    %v573 = vld [vmem:[%s4 + $0x8] sm:$0xf]
    %v574 = vld [vmem:[%s4 + $0xc] sm:$0xf]
    %v575 = vld [vmem:[%s4 + $0x10] sm:$0xf]
    %v576 = vld [vmem:[%s4 + $0x14] sm:$0xf]
    %v577 = vld [vmem:[%s4 + $0x18] sm:$0xf]
    %v578 = vld [vmem:[%s4 + $0x1c] sm:$0xf]
    %v579 = vld [vmem:[%s4 + $0x20] sm:$0xf]
    %v580 = vld [vmem:[%s4 + $0x24] sm:$0xf]
    %v581 = vld [vmem:[%s4 + $0x28] sm:$0xf]
    %v582 = vld [vmem:[%s4 + $0x2c] sm:$0xf]
    %v583 = vld [vmem:[%s4 + $0x30] sm:$0xf]
    %v584 = vld [vmem:[%s4 + $0x34] sm:$0xf]
    %v585 = vld [vmem:[%s4 + $0x38] sm:$0xf]
    %v586 = vld [vmem:[%s4 + $0x3c] sm:$0xf]
    %v587 = vld [vmem:[%s5] sm:$0x1]
    %v589 = vlaneseq
    %v590 = vshrl.u32 %v589, 7
    %v591 = vsub.s32 0, %v590
    %v592 = vrot.slane %v587, %v591
    %v610 = vunpack.c.l.b16 %v571
    %v611 = vunpack.c.l.b16 %v572
    %v612 = vunpack.c.l.b16 %v573
    %v613 = vunpack.c.l.b16 %v574
    %v614 = vunpack.c.l.b16 %v575
    %v615 = vunpack.c.l.b16 %v576
    %v616 = vunpack.c.l.b16 %v577
    %v617 = vunpack.c.l.b16 %v578
    %v618 = vunpack.c.l.b16 %v579
    %v619 = vunpack.c.l.b16 %v580
    %v620 = vunpack.c.l.b16 %v581
    %v621 = vunpack.c.l.b16 %v582
    %v622 = vunpack.c.l.b16 %v583
    %v623 = vunpack.c.l.b16 %v584
    %v624 = vunpack.c.l.b16 %v585
    %v625 = vunpack.c.l.b16 %v586
    %v626 = vpack.c.b16 %v611, %v610
    %v627 = vpack.c.b16 %v613, %v612
    %v628 = vpack.c.b16 %v615, %v614
    %v629 = vpack.c.b16 %v617, %v616
    %v630 = vpack.c.b16 %v619, %v618
    %v631 = vpack.c.b16 %v621, %v620
    %v632 = vpack.c.b16 %v623, %v622
    %v633 = vpack.c.b16 %v625, %v624
    %642 = vmatprep.subr.bf16.mxu0 0
    %643 = vmatpush1.bf16.msra.mxu0 %v626
    %644 = vmatprep.subr.bf16.mxu0 0
    %645 = vmatpush1.bf16.msra.mxu0 %v627
    %646 = vmatprep.subr.bf16.mxu0 0
    %647 = vmatpush1.bf16.msra.mxu0 %v628
    %648 = vmatprep.subr.bf16.mxu0 0
    %649 = vmatpush1.bf16.msra.mxu0 %v629
    %650 = vmatprep.subr.bf16.mxu0 0
    %651 = vmatpush1.bf16.msra.mxu0 %v630
    %652 = vmatprep.subr.bf16.mxu0 0
    %653 = vmatpush1.bf16.msra.mxu0 %v631
    %654 = vmatprep.subr.bf16.mxu0 0
    %655 = vmatpush1.bf16.msra.mxu0 %v632
    %656 = vmatprep.subr.bf16.mxu0 0
    %657 = vmatpush1.bf16.msra.mxu0 %v633
    %658 = vmatprep.subr.bf16.mxu0 0
    %659 = vmatpush1.bf16.msra.mxu0 0
    %660 = vmatprep.subr.bf16.mxu0 0
    %661 = vmatpush1.bf16.msra.mxu0 0
    %662 = vmatprep.subr.bf16.mxu0 0
    %663 = vmatpush1.bf16.msra.mxu0 0
    %664 = vmatprep.subr.bf16.mxu0 0
    %665 = vmatpush1.bf16.msra.mxu0 0
    %666 = vmatprep.subr.bf16.mxu0 0
    %667 = vmatpush1.bf16.msra.mxu0 0
    %668 = vmatprep.subr.bf16.mxu0 0
    %669 = vmatpush1.bf16.msra.mxu0 0
    %670 = vmatprep.subr.bf16.mxu0 0
    %671 = vmatpush1.bf16.msra.mxu0 0
    %672 = vmatprep.subr.bf16.mxu0 0
    %673 = vmatpush1.bf16.msra.mxu0 0
    %674 = vmatprep.mubr.bf16.mxu0 0
    %675 = vmatmul.mubr.bf16.gmra.mrb[0].mxu0 %v570
    %v676 = vpop.f32.mrb[0].mxu0
    %v677 = vadd.f32 %v592, %v676
    %v678 = vpop.f32.mrb[0].mxu0
    %v679 = vpop.f32.mrb[0].mxu0
    %v680 = vpop.f32.mrb[0].mxu0
    %681 = vdwg.mxu0
    %682 = vst [vmem:[%s6] sm:$0xff] %v677
    // Predicated region
    $region34: #{decoder_forward.1} parent=1 // pred_check
      _
    $region35: #{decoder_forward.1} parent=1 // pred_check_branch
      %684 = sbr.rel (0) target = $region37
    $region36: #{decoder_forward.1} parent=1 // pred_region
      _
    $region37: #{decoder_forward.1} parent=1 // pred_fallthru
      _
    // Predicated region
    $region38: #{decoder_forward.1} parent=1 // pred_check
      _
    $region39: #{decoder_forward.1} parent=1 // pred_check_branch
      %686 = sbr.rel (0) target = $region41
    $region40: #{decoder_forward.1} parent=1 // pred_region
      _
    $region41: #{decoder_forward.1} parent=1 // pred_fallthru
      _
    // Predicated region
    $region42: #{decoder_forward.1} parent=1 // pred_check
      _
    $region43: #{decoder_forward.1} parent=1 // pred_check_branch
      %688 = sbr.rel (0) target = $region45
    $region44: #{decoder_forward.1} parent=1 // pred_region
      _
    $region45: #{decoder_forward.1} parent=1 // pred_fallthru
      _
    // Predicated region
    $region46: #{decoder_forward.1} parent=1 // pred_check
      _
    $region47: #{decoder_forward.1} parent=1 // pred_check_branch
      %690 = sbr.rel (0) target = $region49
    $region48: #{decoder_forward.1} parent=1 // pred_region
      _
    $region49: #{decoder_forward.1} parent=1 // pred_fallthru
      _
    // Predicated region
    $region50: #{decoder_forward.1} parent=1 // pred_check
      _
    $region51: #{decoder_forward.1} parent=1 // pred_check_branch
      %692 = sbr.rel (0) target = $region53
    $region52: #{decoder_forward.1} parent=1 // pred_region
      _
    $region53: #{decoder_forward.1} parent=1 // pred_fallthru
      _
    // Predicated region
    $region54: #{decoder_forward.1} parent=1 // pred_check
      _
    $region55: #{decoder_forward.1} parent=1 // pred_check_branch
      %694 = sbr.rel (0) target = $region57
    $region56: #{decoder_forward.1} parent=1 // pred_region
      _
    $region57: #{decoder_forward.1} parent=1 // pred_fallthru
      _
    %695 = vsyncpa [#allocation4], 1

</llo_original>
